<compile_context>
chip_gen: v7x
topology: tpu7x:2x2x1
jax: 0.10.0
libtpu: 0.0.40
codegen_flags: <defaults>
</compile_context>

<pallas_src>
import jax
import jax.numpy as jnp
from jax.experimental import pallas as pl
from jax.experimental.pallas import tpu as pltpu


# ------------------------------ helpers --------------------------------------
def _round_up(n, m):
    return ((n + m - 1) // m) * m


def _pad2d(a, rows, cols):
    return jnp.pad(a, ((0, rows - a.shape[0]), (0, cols - a.shape[1])))


def _bf16(a):
    return a.astype(jnp.bfloat16)


def _pick_block(n, candidates):
    """Largest candidate block size that divides n (n is a multiple of 128)."""
    for c in candidates:
        if n % c == 0:
            return c
    return n


def _vmem_limit_bytes(frac=0.75, fallback=48 * 1024 * 1024):
    """~75% of physical VMEM per generation (48 MiB v7x, ~96 MiB v5e/v6e)."""
    try:
        cap = getattr(pltpu.get_tpu_info(), "vmem_capacity_bytes", None)
        if cap:
            return int(cap * frac)
    except Exception:
        pass
    return fallback


# ----------------------------- Pallas kernels --------------------------------
def dense_proj_kernel(x_ref, w_ref, o_ref):
    """hw = x @ W'   (row-blocked, bf16 MXU, f32 accumulate, store bf16)."""
    o_ref[...] = jnp.dot(x_ref[...], w_ref[...],
                         preferred_element_type=jnp.float32).astype(jnp.bfloat16)


def gcn_agg_proj_kernel(a_ref, hw_ref, b_ref, wn_ref, o_ref, acc_ref):
    """One GCN layer tile: acc += A_tile @ hw_tile; at last neighbour block
    apply folded bias + ReLU and project by the *next* layer's weight so the
    output of this call is directly the next layer's hw."""
    k = pl.program_id(1)

    @pl.when(k == 0)
    def _():
        acc_ref[...] = jnp.zeros_like(acc_ref)

    acc_ref[...] += jnp.dot(a_ref[...], hw_ref[...],
                            preferred_element_type=jnp.float32)

    @pl.when(k == pl.num_programs(1) - 1)
    def _():
        h = jnp.maximum(acc_ref[...] + b_ref[...], 0.0)       # f32 epilogue
        o_ref[...] = jnp.dot(h.astype(jnp.bfloat16), wn_ref[...],
                             preferred_element_type=jnp.float32).astype(jnp.bfloat16)


def gcn_agg_final_kernel(a_ref, hw_ref, b_ref, o_ref, acc_ref):
    """Last GCN layer tile: aggregation + folded bias, no ReLU, no projection."""
    k = pl.program_id(1)

    @pl.when(k == 0)
    def _():
        acc_ref[...] = jnp.zeros_like(acc_ref)

    acc_ref[...] += jnp.dot(a_ref[...], hw_ref[...],
                            preferred_element_type=jnp.float32)

    @pl.when(k == pl.num_programs(1) - 1)
    def _():
        o_ref[...] = (acc_ref[...] + b_ref[...]).astype(jnp.bfloat16)


def pool_classifier_kernel(p_ref, h_ref, inv_ref, wc1_ref, zc_ref, wc2_ref,
                           bc2_ref, o_ref, acc_ref):
    """Streaming sum-pool over node blocks; epilogue: exact f32 1/count mean
    scaling + MLP classifier (the x_orig branch arrives precomputed as zc)."""
    k = pl.program_id(0)

    @pl.when(k == 0)
    def _():
        acc_ref[...] = jnp.zeros_like(acc_ref)

    acc_ref[...] += jnp.dot(p_ref[...], h_ref[...],
                            preferred_element_type=jnp.float32)

    @pl.when(k == pl.num_programs(0) - 1)
    def _():
        pooled = acc_ref[...] * inv_ref[...]                   # exact mean (f32)
        z = jnp.dot(pooled.astype(jnp.bfloat16), wc1_ref[...],
                    preferred_element_type=jnp.float32) + zc_ref[...]
        z = jnp.maximum(z, 0.0)
        o_ref[...] = jnp.dot(z.astype(jnp.bfloat16), wc2_ref[...],
                             preferred_element_type=jnp.float32) + bc2_ref[...]


# ------------------------------ JAX glue --------------------------------------
def build_normalized_adjacency(edge_index, num_nodes):
    """A_hat = D^-1/2 (A + I) D^-1/2, messages flow src -> dst (PyG GCNConv)."""
    src, dst = edge_index[0], edge_index[1]
    a = jnp.zeros((num_nodes, num_nodes), jnp.float32)
    a = a.at[dst, src].set(1.0)                       # aggregate at target node
    a = a + jnp.eye(num_nodes, dtype=jnp.float32)     # add self loops
    deg = jnp.sum(a, axis=1)
    d_inv_sqrt = jnp.where(deg > 0, 1.0 / jnp.sqrt(deg), 0.0)
    return a * d_inv_sqrt[:, None] * d_inv_sqrt[None, :]


def build_sum_pool(batch, num_graphs):
    """0/1 graph-membership matrix (exact in bf16) and per-graph node counts."""
    onehot = (batch[None, :] == jnp.arange(num_graphs)[:, None]).astype(jnp.float32)
    counts = jnp.sum(onehot, axis=1, keepdims=True)   # (G, 1)
    return onehot, counts


def init_params(key, input_size, hidden, num_classes):
    ks = jax.random.split(key, 8)

    def dense(k, fan_in, fan_out):
        return (jax.random.normal(k, (fan_in, fan_out), jnp.float32)
                * (1.0 / jnp.sqrt(fan_in)))

    p = {}
    p["w1"], p["b1"] = dense(ks[0], input_size, hidden), jnp.zeros((hidden,), jnp.float32)
    p["w2"], p["b2"] = dense(ks[1], hidden, hidden), jnp.zeros((hidden,), jnp.float32)
    p["w3"], p["b3"] = dense(ks[2], hidden, hidden), jnp.zeros((hidden,), jnp.float32)
    for i in range(1, 4):
        p[f"bn{i}_gamma"] = jnp.ones((hidden,), jnp.float32)
        p[f"bn{i}_beta"] = jnp.zeros((hidden,), jnp.float32)
        p[f"bn{i}_mean"] = jnp.zeros((hidden,), jnp.float32)
        p[f"bn{i}_var"] = jnp.ones((hidden,), jnp.float32)
    half = hidden // 2
    p["wc1"] = dense(ks[3], hidden + input_size, half)
    p["bc1"] = jnp.zeros((half,), jnp.float32)
    p["wc2"] = dense(ks[4], half, num_classes)
    p["bc2"] = jnp.zeros((num_classes,), jnp.float32)
    return p


def _fold_gcn_bn(w, b, gamma, beta, mean, var, eps=1e-5):
    """Fold eval-mode BatchNorm (and the GCN bias) into the weight/bias."""
    s = gamma / jnp.sqrt(var + eps)
    return w * s[None, :], b * s + (beta - s * mean)


def gnn_forward(x, edge_index, batch, params, num_graphs, num_classes):
    """Full GNNModel forward as a chain of tiled Pallas kernels."""
    n, f_in = x.shape
    hidden = params["w1"].shape[1]
    half = params["wc1"].shape[1]

    # ----- host-side structure build (glue, not kernel work) -----------------
    a_hat = build_normalized_adjacency(edge_index, n)           # (N, N) f32
    pool_sum, counts = build_sum_pool(batch, num_graphs)        # (G, N), (G, 1)

    # ----- fold BN + bias into GCN weights ------------------------------------
    w1, b1 = _fold_gcn_bn(params["w1"], params["b1"], params["bn1_gamma"],
                          params["bn1_beta"], params["bn1_mean"], params["bn1_var"])
    w2, b2 = _fold_gcn_bn(params["w2"], params["b2"], params["bn2_gamma"],
                          params["bn2_beta"], params["bn2_mean"], params["bn2_var"])
    w3, b3 = _fold_gcn_bn(params["w3"], params["b3"], params["bn3_gamma"],
                          params["bn3_beta"], params["bn3_mean"], params["bn3_var"])

    # ----- hoist the x_orig pooled branch of the classifier (exact f32) -------
    wc1a = params["wc1"][:hidden, :]                             # pooled GNN feats
    wc1b = params["wc1"][hidden:, :]                             # pooled x_orig
    x_orig_pooled = (pool_sum @ x) / jnp.maximum(counts, 1.0)    # (G, F) f32
    zc = x_orig_pooled @ wc1b + params["bc1"][None, :]           # (G, half)

    # ----- padded, lane-dense shapes ------------------------------------------
    n_p = _round_up(n, 128)
    f_p = _round_up(f_in, 128)
    h_p = _round_up(hidden, 128)
    hf_p = _round_up(half, 128)
    c_p = _round_up(num_classes, 128)
    g_p = _round_up(num_graphs, 8)

    # row block ('parallel' -> shards across v7x's 2 TCs); neighbour block
    # ('arbitrary' contraction) at 512/256 to fill the v6e/v7x 2x256 MXU.
    tm = _pick_block(n_p, (256, 128))
    tk = _pick_block(n_p, (512, 256, 128))

    vmem = _vmem_limit_bytes()
    cp_rows = pltpu.CompilerParams(dimension_semantics=("parallel",),
                                   vmem_limit_bytes=vmem)
    cp_agg = pltpu.CompilerParams(dimension_semantics=("parallel", "arbitrary"),
                                  vmem_limit_bytes=vmem)
    cp_pool = pltpu.CompilerParams(dimension_semantics=("arbitrary",),
                                   vmem_limit_bytes=vmem)

    # ----- padded operands -----------------------------------------------------
    x_pad = _bf16(_pad2d(x, n_p, f_p))
    a_pad = _bf16(_pad2d(a_hat, n_p, n_p))
    psum_pad = _bf16(_pad2d(pool_sum, g_p, n_p))                 # 0/1 -> exact bf16
    inv_cnt = _pad2d(1.0 / jnp.maximum(counts, 1.0), g_p, 1)     # f32 (G_p, 1)

    w1_pad = _bf16(_pad2d(w1, f_p, h_p))
    w2_pad = _bf16(_pad2d(w2, h_p, h_p))
    w3_pad = _bf16(_pad2d(w3, h_p, h_p))
    b1_pad = _pad2d(b1[None, :], 1, h_p)
    b2_pad = _pad2d(b2[None, :], 1, h_p)
    b3_pad = _pad2d(b3[None, :], 1, h_p)
    wc1a_pad = _bf16(_pad2d(wc1a, h_p, hf_p))
    zc_pad = _pad2d(zc, g_p, hf_p)
    wc2_pad = _bf16(_pad2d(params["wc2"], hf_p, c_p))
    bc2_pad = _pad2d(params["bc2"][None, :], 1, c_p)

    # ----- call 1: hw1 = x @ W1'  (row-blocked dense projection) -------------
    hw = pl.pallas_call(
        dense_proj_kernel,
        out_shape=jax.ShapeDtypeStruct((n_p, h_p), jnp.bfloat16),
        grid=(n_p // tm,),
        in_specs=[pl.BlockSpec((tm, f_p), lambda i: (i, 0)),
                  pl.BlockSpec((f_p, h_p), lambda i: (0, 0))],
        out_specs=pl.BlockSpec((tm, h_p), lambda i: (i, 0)),
        compiler_params=cp_rows,
    )(x_pad, w1_pad)

    # ----- calls 2/3: tiled aggregation + bias + ReLU + next projection -------
    def agg_proj(hw_in, b_pad, w_next_pad):
        flops = 2 * n_p * n_p * h_p + 2 * n_p * h_p * h_p
        byts = int(2 * n_p * n_p + 2 * n_p * h_p * (n_p // tm) + 2 * n_p * h_p)
        return pl.pallas_call(
            gcn_agg_proj_kernel,
            out_shape=jax.ShapeDtypeStruct((n_p, h_p), jnp.bfloat16),
            grid=(n_p // tm, n_p // tk),
            in_specs=[pl.BlockSpec((tm, tk), lambda i, k: (i, k)),
                      pl.BlockSpec((tk, h_p), lambda i, k: (k, 0)),
                      pl.BlockSpec((1, h_p), lambda i, k: (0, 0)),
                      pl.BlockSpec((h_p, h_p), lambda i, k: (0, 0))],
            out_specs=pl.BlockSpec((tm, h_p), lambda i, k: (i, 0)),
            scratch_shapes=[pltpu.VMEM((tm, h_p), jnp.float32)],
            compiler_params=cp_agg,
            cost_estimate=pl.CostEstimate(flops=flops, transcendentals=0,
                                          bytes_accessed=byts),
        )(a_pad, hw_in, b_pad, w_next_pad)

    hw = agg_proj(hw, b1_pad, w2_pad)     # conv1 -> bn1 -> relu -> (@W2')
    hw = agg_proj(hw, b2_pad, w3_pad)     # conv2 -> bn2 -> relu -> (@W3')

    # ----- call 4: final aggregation (conv3 -> bn3, no ReLU) ------------------
    h3 = pl.pallas_call(
        gcn_agg_final_kernel,
        out_shape=jax.ShapeDtypeStruct((n_p, h_p), jnp.bfloat16),
        grid=(n_p // tm, n_p // tk),
        in_specs=[pl.BlockSpec((tm, tk), lambda i, k: (i, k)),
                  pl.BlockSpec((tk, h_p), lambda i, k: (k, 0)),
                  pl.BlockSpec((1, h_p), lambda i, k: (0, 0))],
        out_specs=pl.BlockSpec((tm, h_p), lambda i, k: (i, 0)),
        scratch_shapes=[pltpu.VMEM((tm, h_p), jnp.float32)],
        compiler_params=cp_agg,
        cost_estimate=pl.CostEstimate(flops=2 * n_p * n_p * h_p, transcendentals=0,
                                      bytes_accessed=int(2 * n_p * n_p + 4 * n_p * h_p)),
    )(a_pad, hw, b3_pad)

    # ----- call 5: streaming mean pool + MLP classifier -----------------------
    out_padded = pl.pallas_call(
        pool_classifier_kernel,
        out_shape=jax.ShapeDtypeStruct((g_p, c_p), jnp.float32),
        grid=(n_p // tk,),
        in_specs=[pl.BlockSpec((g_p, tk), lambda k: (0, k)),    # sum-pool tile
                  pl.BlockSpec((tk, h_p), lambda k: (k, 0)),    # h3 tile
                  pl.BlockSpec((g_p, 1), lambda k: (0, 0)),     # 1/count (f32)
                  pl.BlockSpec((h_p, hf_p), lambda k: (0, 0)),  # wc1a
                  pl.BlockSpec((g_p, hf_p), lambda k: (0, 0)),  # zc (x_orig branch)
                  pl.BlockSpec((hf_p, c_p), lambda k: (0, 0)),  # wc2
                  pl.BlockSpec((1, c_p), lambda k: (0, 0))],    # bc2
        out_specs=pl.BlockSpec((g_p, c_p), lambda k: (0, 0)),
        scratch_shapes=[pltpu.VMEM((g_p, h_p), jnp.float32)],
        compiler_params=cp_pool,
    )(psum_pad, h3, inv_cnt, wc1a_pad, zc_pad, wc2_pad, bc2_pad)

    return out_padded[:num_graphs, :num_classes]


# ------------------------------- main ------------------------------------------
if __name__ == "__main__":
    key = jax.random.PRNGKey(0)
    k_x, k_p = jax.random.split(key)

    nodes_per_graph = 8
    num_graphs = 16            # 16 graphs x 8 nodes = 128 nodes -> fills one node tile
    N = nodes_per_graph * num_graphs
    input_size = 8
    hidden = 32
    num_classes = 4

    # node features
    x = jax.random.normal(k_x, (N, input_size), jnp.float32)

    # batch assignment: nodes of graph g are contiguous
    batch = jnp.repeat(jnp.arange(num_graphs, dtype=jnp.int32), nodes_per_graph)

    # deterministic undirected chain edges within each graph
    src_list, dst_list = [], []
    for g in range(num_graphs):
        base = g * nodes_per_graph
        for i in range(nodes_per_graph - 1):
            src_list += [base + i, base + i + 1]
            dst_list += [base + i + 1, base + i]
    edge_index = jnp.array([src_list, dst_list], jnp.int32)   # (2, E)

    params = init_params(k_p, input_size, hidden, num_classes)

    out = gnn_forward(x, edge_index, batch, params, num_graphs, num_classes)
    out = jax.block_until_ready(out)
    assert out.shape == (num_graphs, num_classes)
    assert bool(jnp.all(jnp.isfinite(out)))
    print("KERNEL_OK")
</pallas_src>

<mosaic_0001>
module attributes {stable_mosaic.version = 11 : i64} {
  func.func @dense_proj_kernel(%arg0: i32, %arg1: memref<128x128xbf16, #tpu.memory_space<vmem>>, %arg2: memref<128x128xbf16, #tpu.memory_space<vmem>>, %arg3: memref<128x128xbf16, #tpu.memory_space<vmem>>) attributes {dimension_semantics = [#tpu.dimension_semantics<parallel>], iteration_bounds = array<i64: 1>, scalar_prefetch = 0 : i64, scratch_operands = 0 : i64, tpu.core_type = #tpu.core_type<tc>, window_params = [{transform_indices = @transform_0, window_bounds = array<i64: 128, 128>}, {pipeline_mode = #tpu.pipeline_mode<synchronous>, transform_indices = @transform_1, window_bounds = array<i64: 128, 128>}, {transform_indices = @transform_2, window_bounds = array<i64: 128, 128>}]} {
    %c0 = arith.constant 0 : index
    %c0_0 = arith.constant 0 : index
    %0 = vector.load %arg1[%c0, %c0_0] : memref<128x128xbf16, #tpu.memory_space<vmem>>, vector<128x128xbf16>
    %c0_1 = arith.constant 0 : index
    %c0_2 = arith.constant 0 : index
    %1 = vector.load %arg2[%c0_1, %c0_2] : memref<128x128xbf16, #tpu.memory_space<vmem>>, vector<128x128xbf16>
    %cst = arith.constant dense<0.000000e+00> : vector<128x128xf32>
    %2 = tpu.matmul %0, %1, %cst {dimension_numbers = #tpu.dot_dimension_numbers<[1], [0], [0], [1], [0, 0, 1, 1], [], []>} : vector<128x128xbf16>, vector<128x128xbf16>, vector<128x128xf32> -> vector<128x128xf32>
    %3 = arith.truncf %2 : vector<128x128xf32> to vector<128x128xbf16>
    %c0_3 = arith.constant 0 : index
    %c0_4 = arith.constant 0 : index
    %4 = vector.load %arg3[%c0_3, %c0_4] : memref<128x128xbf16, #tpu.memory_space<vmem>>, vector<128x128xbf16>
    tpu.vector_store %arg3[%c0_3, %c0_4], %3 {strides = array<i32>} : memref<128x128xbf16, #tpu.memory_space<vmem>>, vector<128x128xbf16>,
    return
  }
  func.func @transform_0(%arg0: i32) -> (i32, i32) {
    %c0_i32 = arith.constant 0 : i32
    %c0_i32_0 = arith.constant 0 : i32
    return %arg0, %c0_i32 : i32, i32
  }
  func.func @transform_1(%arg0: i32) -> (i32, i32) {
    %c0_i32 = arith.constant 0 : i32
    %c0_i32_0 = arith.constant 0 : i32
    %c0_i32_1 = arith.constant 0 : i32
    return %c0_i32, %c0_i32_0 : i32, i32
  }
  func.func @transform_2(%arg0: i32) -> (i32, i32) {
    %c0_i32 = arith.constant 0 : i32
    %c0_i32_0 = arith.constant 0 : i32
    return %arg0, %c0_i32 : i32, i32
  }
}

</mosaic_0001>

<llo_original>
// kernel: tpu_custom_call.1
$region0: #{tpu_custom_call.1}
  #allocation0 [shape = 'u32[]', space=smem, size = 0x4, offset = 0x4, fixed_abs, tag = 'smem constant byte address 0x4 - core index']
  #allocation1 [shape = 'u32[144,128]{1,0:T(1,128)}', space=vmem, size = 0x12000, scoped, tag = 'internal scratch']
  %s0 = inlined_call_operand.hbm [shape: bf16[128,128], index: 0, kind: input, shape index: {}]
  %s1 = inlined_call_operand.hbm [shape: bf16[128,128], index: 1, kind: input, shape index: {}]
  %s2 = inlined_call_operand.hbm [shape: bf16[128,128], index: 2, kind: output, shape index: {}]
  %s3 = sld [smem:[#allocation0]]
  $region26: #{tpu_custom_call.1} parent=0
    _
  %s5 = ssub.s32 1, %s3
  %s6 = scalar_select 0, %s5, %s3
  $region1: #{tpu_custom_call.1} parent=0
    #allocation2 [shape = 'u8[32768]{0}', space=vmem, size = 0x8000, scoped, tag = 'input window, operand 0, single buffered']
    #allocation3 [shape = 's32[1]{0}', space=sflag, size = 0x4, scoped, tag = 'scoped memory for tpu_custom_call.1']
    #allocation4 [shape = 's32[1]{0}', space=sflag, size = 0x4, scoped, tag = 'scoped memory for tpu_custom_call.1']
    #allocation5 [shape = 'u8[32768]{0}', space=vmem, size = 0x8000, scoped, tag = 'input window, operand 1, single buffered']
    #allocation6 [shape = 's32[1]{0}', space=sflag, size = 0x4, scoped, tag = 'scoped memory for tpu_custom_call.1']
    #allocation7 [shape = 'u8[32768]{0}', space=vmem, size = 0x8000, scoped, tag = 'output window, operand 0, single buffered']
    %7 = vsyncpa [#allocation3], 0
    %8 = vsyncpa [#allocation6], 0
    %9 = vsyncpa [#allocation4], 0
    // Predicated region
    $region2: #{tpu_custom_call.1} parent=1 // pred_check
      _
    $region3: #{tpu_custom_call.1} parent=1 // pred_check_branch
      %11 = sbr.rel (0) target = $region5
    $region4: #{tpu_custom_call.1} parent=1 // pred_region
      %s13 = ssub.s32 1024, 1024
      %14 = vsyncadd [#allocation3], %s13
      %s15 = sshll.u32 [#allocation2], 4
      %s16 = int_to_ptr.vmem [resolvable:$true] %s15
      %21 = dma.hbm_to_vmem [thread:$0]  %s0, 1024, %s16, [#allocation3], 64, 64, 4
    $region5: #{tpu_custom_call.1} parent=1 // pred_fallthru
      _
    // Predicated region
    $region6: #{tpu_custom_call.1} parent=1 // pred_check
      _
    $region7: #{tpu_custom_call.1} parent=1 // pred_check_branch
      %23 = sbr.rel (0) target = $region9
    $region8: #{tpu_custom_call.1} parent=1 // pred_region
      %s25 = ssub.s32 1024, 1024
      %26 = vsyncadd [#allocation6], %s25
      %s27 = sshll.u32 [#allocation5], 4
      %s28 = int_to_ptr.vmem [resolvable:$true] %s27
      %33 = dma.hbm_to_vmem [thread:$0]  %s1, 1024, %s28, [#allocation6], 64, 64, 4
    $region9: #{tpu_custom_call.1} parent=1 // pred_fallthru
      _
    // Predicated region
    $region10: #{tpu_custom_call.1} parent=1 // pred_check
      _
    $region11: #{tpu_custom_call.1} parent=1 // pred_check_branch
      %35 = sbr.rel (0) target = $region13
    $region12: #{tpu_custom_call.1} parent=1 // pred_region
      %36 = dma.done [#allocation3], 1024
    $region13: #{tpu_custom_call.1} parent=1 // pred_fallthru
      _
    // Predicated region
    $region14: #{tpu_custom_call.1} parent=1 // pred_check
      _
    $region15: #{tpu_custom_call.1} parent=1 // pred_check_branch
      %38 = sbr.rel (0) target = $region17
    $region16: #{tpu_custom_call.1} parent=1 // pred_region
      %39 = dma.done [#allocation6], 1024
    $region17: #{tpu_custom_call.1} parent=1 // pred_fallthru
      _
    %v41 = vld [vmem:[#allocation2] sm:$0xf]
    %v42 = vld [vmem:[#allocation2 + $0x4] sm:$0xf]
    %v43 = vld [vmem:[#allocation2 + $0x8] sm:$0xf]
    %v44 = vld [vmem:[#allocation2 + $0xc] sm:$0xf]
    %v45 = vld [vmem:[#allocation2 + $0x10] sm:$0xf]
    %v46 = vld [vmem:[#allocation2 + $0x14] sm:$0xf]
    %v47 = vld [vmem:[#allocation2 + $0x18] sm:$0xf]
    %v48 = vld [vmem:[#allocation2 + $0x1c] sm:$0xf]
    %v49 = vld [vmem:[#allocation2 + $0x20] sm:$0xf]
    %v50 = vld [vmem:[#allocation2 + $0x24] sm:$0xf]
    %v51 = vld [vmem:[#allocation2 + $0x28] sm:$0xf]
    %v52 = vld [vmem:[#allocation2 + $0x2c] sm:$0xf]
    %v53 = vld [vmem:[#allocation2 + $0x30] sm:$0xf]
    %v54 = vld [vmem:[#allocation2 + $0x34] sm:$0xf]
    %v55 = vld [vmem:[#allocation2 + $0x38] sm:$0xf]
    %v56 = vld [vmem:[#allocation2 + $0x3c] sm:$0xf]
    %v57 = vld [vmem:[#allocation5] sm:$0xf]
    %v58 = vld [vmem:[#allocation5 + $0x4] sm:$0xf]
    %v59 = vld [vmem:[#allocation5 + $0x8] sm:$0xf]
    %v60 = vld [vmem:[#allocation5 + $0xc] sm:$0xf]
    %v61 = vld [vmem:[#allocation5 + $0x10] sm:$0xf]
    %v62 = vld [vmem:[#allocation5 + $0x14] sm:$0xf]
    %v63 = vld [vmem:[#allocation5 + $0x18] sm:$0xf]
    %v64 = vld [vmem:[#allocation5 + $0x1c] sm:$0xf]
    %v65 = vld [vmem:[#allocation5 + $0x20] sm:$0xf]
    %v66 = vld [vmem:[#allocation5 + $0x24] sm:$0xf]
    %v67 = vld [vmem:[#allocation5 + $0x28] sm:$0xf]
    %v68 = vld [vmem:[#allocation5 + $0x2c] sm:$0xf]
    %v69 = vld [vmem:[#allocation5 + $0x30] sm:$0xf]
    %v70 = vld [vmem:[#allocation5 + $0x34] sm:$0xf]
    %v71 = vld [vmem:[#allocation5 + $0x38] sm:$0xf]
    %v72 = vld [vmem:[#allocation5 + $0x3c] sm:$0xf]
    %v89 = vunpack.c.l.b16 %v41
    %v90 = vunpack.c.l.b16 %v42
    %v91 = vunpack.c.l.b16 %v43
    %v92 = vunpack.c.l.b16 %v44
    %v93 = vunpack.c.l.b16 %v45
    %v94 = vunpack.c.l.b16 %v46
    %v95 = vunpack.c.l.b16 %v47
    %v96 = vunpack.c.l.b16 %v48
    %v97 = vunpack.c.l.b16 %v49
    %v98 = vunpack.c.l.b16 %v50
    %v99 = vunpack.c.l.b16 %v51
    %v100 = vunpack.c.l.b16 %v52
    %v101 = vunpack.c.l.b16 %v53
    %v102 = vunpack.c.l.b16 %v54
    %v103 = vunpack.c.l.b16 %v55
    %v104 = vunpack.c.l.b16 %v56
    %v105 = vpack.c.b16 %v90, %v89
    %v106 = vpack.c.b16 %v92, %v91
    %v107 = vpack.c.b16 %v94, %v93
    %v108 = vpack.c.b16 %v96, %v95
    %v109 = vpack.c.b16 %v98, %v97
    %v110 = vpack.c.b16 %v100, %v99
    %v111 = vpack.c.b16 %v102, %v101
    %v112 = vpack.c.b16 %v104, %v103
    %v137 = vunpack.c.l.b16 %v57
    %v138 = vunpack.c.l.b16 %v58
    %v139 = vunpack.c.l.b16 %v59
    %v140 = vunpack.c.l.b16 %v60
    %v141 = vunpack.c.l.b16 %v61
    %v142 = vunpack.c.l.b16 %v62
    %v143 = vunpack.c.l.b16 %v63
    %v144 = vunpack.c.l.b16 %v64
    %v145 = vunpack.c.l.b16 %v65
    %v146 = vunpack.c.l.b16 %v66
    %v147 = vunpack.c.l.b16 %v67
    %v148 = vunpack.c.l.b16 %v68
    %v149 = vunpack.c.l.b16 %v69
    %v150 = vunpack.c.l.b16 %v70
    %v151 = vunpack.c.l.b16 %v71
    %v152 = vunpack.c.l.b16 %v72
    %v153 = vpack.c.b16 %v138, %v137
    %v154 = vpack.c.b16 %v140, %v139
    %v155 = vpack.c.b16 %v142, %v141
    %v156 = vpack.c.b16 %v144, %v143
    %v157 = vpack.c.b16 %v146, %v145
    %v158 = vpack.c.b16 %v148, %v147
    %v159 = vpack.c.b16 %v150, %v149
    %v160 = vpack.c.b16 %v152, %v151
    %169 = vmatprep.subr.bf16.mxu0 0
    %170 = vmatpush1.bf16.msra.mxu0 %v153
    %171 = vmatprep.subr.bf16.mxu0 0
    %172 = vmatpush1.bf16.msra.mxu0 %v154
    %173 = vmatprep.subr.bf16.mxu0 0
    %174 = vmatpush1.bf16.msra.mxu0 %v155
    %175 = vmatprep.subr.bf16.mxu0 0
    %176 = vmatpush1.bf16.msra.mxu0 %v156
    %177 = vmatprep.subr.bf16.mxu0 0
    %178 = vmatpush1.bf16.msra.mxu0 %v157
    %179 = vmatprep.subr.bf16.mxu0 0
    %180 = vmatpush1.bf16.msra.mxu0 %v158
    %181 = vmatprep.subr.bf16.mxu0 0
    %182 = vmatpush1.bf16.msra.mxu0 %v159
    %183 = vmatprep.subr.bf16.mxu0 0
    %184 = vmatpush1.bf16.msra.mxu0 %v160
    %185 = vmatprep.subr.bf16.mxu0 0
    %186 = vmatpush1.bf16.msra.mxu0 0
    %187 = vmatprep.subr.bf16.mxu0 0
    %188 = vmatpush1.bf16.msra.mxu0 0
    %189 = vmatprep.subr.bf16.mxu0 0
    %190 = vmatpush1.bf16.msra.mxu0 0
    %191 = vmatprep.subr.bf16.mxu0 0
    %192 = vmatpush1.bf16.msra.mxu0 0
    %193 = vmatprep.subr.bf16.mxu0 0
    %194 = vmatpush1.bf16.msra.mxu0 0
    %195 = vmatprep.subr.bf16.mxu0 0
    %196 = vmatpush1.bf16.msra.mxu0 0
    %197 = vmatprep.subr.bf16.mxu0 0
    %198 = vmatpush1.bf16.msra.mxu0 0
    %199 = vmatprep.subr.bf16.mxu0 0
    %200 = vmatpush1.bf16.msra.mxu0 0
    %201 = vmatprep.mubr.bf16.mxu0 0
    %202 = vmatmul.mubr.bf16.gmra.mrb[0].mxu0 %v105
    %v203 = vpop.f32.mrb[0].mxu0
    %v204 = vadd.f32 0.0, %v203
    %v205 = vpop.f32.mrb[0].mxu0
    %v206 = vpop.f32.mrb[0].mxu0
    %v207 = vadd.f32 0.0, %v206
    %v208 = vpop.f32.mrb[0].mxu0
    %209 = vmatprep.mubr.bf16.mxu0 0
    %210 = vmatmul.mubr.bf16.gmra.mrb[0].mxu0 %v106
    %v211 = vpop.f32.mrb[0].mxu0
    %v212 = vadd.f32 0.0, %v211
    %v213 = vpop.f32.mrb[0].mxu0
    %v214 = vpop.f32.mrb[0].mxu0
    %v215 = vadd.f32 0.0, %v214
    %v216 = vpop.f32.mrb[0].mxu0
    %217 = vmatprep.mubr.bf16.mxu0 0
    %218 = vmatmul.mubr.bf16.gmra.mrb[0].mxu0 %v107
    %v219 = vpop.f32.mrb[0].mxu0
    %v220 = vadd.f32 0.0, %v219
    %v221 = vpop.f32.mrb[0].mxu0
    %v222 = vpop.f32.mrb[0].mxu0
    %v223 = vadd.f32 0.0, %v222
    %v224 = vpop.f32.mrb[0].mxu0
    %225 = vmatprep.mubr.bf16.mxu0 0
    %226 = vmatmul.mubr.bf16.gmra.mrb[0].mxu0 %v108
    %v227 = vpop.f32.mrb[0].mxu0
    %v228 = vadd.f32 0.0, %v227
    %v229 = vpop.f32.mrb[0].mxu0
    %v230 = vpop.f32.mrb[0].mxu0
    %v231 = vadd.f32 0.0, %v230
    %v232 = vpop.f32.mrb[0].mxu0
    %233 = vmatprep.mubr.bf16.mxu0 0
    %234 = vmatmul.mubr.bf16.gmra.mrb[0].mxu0 %v109
    %v235 = vpop.f32.mrb[0].mxu0
    %v236 = vadd.f32 0.0, %v235
    %v237 = vpop.f32.mrb[0].mxu0
    %v238 = vpop.f32.mrb[0].mxu0
    %v239 = vadd.f32 0.0, %v238
    %v240 = vpop.f32.mrb[0].mxu0
    %241 = vmatprep.mubr.bf16.mxu0 0
    %242 = vmatmul.mubr.bf16.gmra.mrb[0].mxu0 %v110
    %v243 = vpop.f32.mrb[0].mxu0
    %v244 = vadd.f32 0.0, %v243
    %v245 = vpop.f32.mrb[0].mxu0
    %v246 = vpop.f32.mrb[0].mxu0
    %v247 = vadd.f32 0.0, %v246
    %v248 = vpop.f32.mrb[0].mxu0
    %249 = vmatprep.mubr.bf16.mxu0 0
    %250 = vmatmul.mubr.bf16.gmra.mrb[0].mxu0 %v111
    %v251 = vpop.f32.mrb[0].mxu0
    %v252 = vadd.f32 0.0, %v251
    %v253 = vpop.f32.mrb[0].mxu0
    %v254 = vpop.f32.mrb[0].mxu0
    %v255 = vadd.f32 0.0, %v254
    %v256 = vpop.f32.mrb[0].mxu0
    %257 = vmatprep.mubr.bf16.mxu0 0
    %258 = vmatmul.mubr.bf16.gmra.mrb[0].mxu0 %v112
    %v259 = vpop.f32.mrb[0].mxu0
    %v260 = vadd.f32 0.0, %v259
    %v261 = vpop.f32.mrb[0].mxu0
    %v262 = vpop.f32.mrb[0].mxu0
    %v263 = vadd.f32 0.0, %v262
    %v264 = vpop.f32.mrb[0].mxu0
    %265 = vdwg.mxu0
    %v266 = vpack.c.bf16 %v207, %v204
    %v267 = vpack.c.bf16 %v215, %v212
    %v268 = vpack.c.bf16 %v223, %v220
    %v269 = vpack.c.bf16 %v231, %v228
    %v270 = vpack.c.bf16 %v239, %v236
    %v271 = vpack.c.bf16 %v247, %v244
    %v272 = vpack.c.bf16 %v255, %v252
    %v273 = vpack.c.bf16 %v263, %v260
    %v282 = vunpack.c.l.b16 %v266
    %v283 = vunpack.c.h.b16 %v266
    %v284 = vunpack.c.l.b16 %v267
    %v285 = vunpack.c.h.b16 %v267
    %v286 = vunpack.c.l.b16 %v268
    %v287 = vunpack.c.h.b16 %v268
    %v288 = vunpack.c.l.b16 %v269
    %v289 = vunpack.c.h.b16 %v269
    %v290 = vunpack.c.l.b16 %v270
    %v291 = vunpack.c.h.b16 %v270
    %v292 = vunpack.c.l.b16 %v271
    %v293 = vunpack.c.h.b16 %v271
    %v294 = vunpack.c.l.b16 %v272
    %v295 = vunpack.c.h.b16 %v272
    %v296 = vunpack.c.l.b16 %v273
    %v297 = vunpack.c.h.b16 %v273
    %v298 = vpack.c.b16 %v282, %v282
    %v299 = vpack.c.b16 %v283, %v283
    %v300 = vpack.c.b16 %v284, %v284
    %v301 = vpack.c.b16 %v285, %v285
    %v302 = vpack.c.b16 %v286, %v286
    %v303 = vpack.c.b16 %v287, %v287
    %v304 = vpack.c.b16 %v288, %v288
    %v305 = vpack.c.b16 %v289, %v289
    %v306 = vpack.c.b16 %v290, %v290
    %v307 = vpack.c.b16 %v291, %v291
    %v308 = vpack.c.b16 %v292, %v292
    %v309 = vpack.c.b16 %v293, %v293
    %v310 = vpack.c.b16 %v294, %v294
    %v311 = vpack.c.b16 %v295, %v295
    %v312 = vpack.c.b16 %v296, %v296
    %v313 = vpack.c.b16 %v297, %v297
    %330 = vst [vmem:[#allocation7] sm:$0xf] %v298
    %331 = vst [vmem:[#allocation7 + $0x4] sm:$0xf] %v299
    %332 = vst [vmem:[#allocation7 + $0x8] sm:$0xf] %v300
    %333 = vst [vmem:[#allocation7 + $0xc] sm:$0xf] %v301
    %334 = vst [vmem:[#allocation7 + $0x10] sm:$0xf] %v302
    %335 = vst [vmem:[#allocation7 + $0x14] sm:$0xf] %v303
    %336 = vst [vmem:[#allocation7 + $0x18] sm:$0xf] %v304
    %337 = vst [vmem:[#allocation7 + $0x1c] sm:$0xf] %v305
    %338 = vst [vmem:[#allocation7 + $0x20] sm:$0xf] %v306
    %339 = vst [vmem:[#allocation7 + $0x24] sm:$0xf] %v307
    %340 = vst [vmem:[#allocation7 + $0x28] sm:$0xf] %v308
    %341 = vst [vmem:[#allocation7 + $0x2c] sm:$0xf] %v309
    %342 = vst [vmem:[#allocation7 + $0x30] sm:$0xf] %v310
    %343 = vst [vmem:[#allocation7 + $0x34] sm:$0xf] %v311
    %344 = vst [vmem:[#allocation7 + $0x38] sm:$0xf] %v312
    %345 = vst [vmem:[#allocation7 + $0x3c] sm:$0xf] %v313
    // Predicated region
    $region18: #{tpu_custom_call.1} parent=1 // pred_check
      _
    $region19: #{tpu_custom_call.1} parent=1 // pred_check_branch
      %347 = sbr.rel (0) target = $region21
    $region20: #{tpu_custom_call.1} parent=1 // pred_region
      %s349 = ssub.s32 1024, 1024
      %350 = vsyncadd [#allocation4], %s349
      %s351 = sshll.u32 [#allocation7], 4
      %s352 = int_to_ptr.vmem [resolvable:$true] %s351
      %357 = dma.vmem_to_hbm [thread:$0]  %s352, 1024, %s2, [#allocation4], 64, 64, 4
    $region21: #{tpu_custom_call.1} parent=1 // pred_fallthru
      _
    // Predicated region
    $region22: #{tpu_custom_call.1} parent=1 // pred_check
      _
    $region23: #{tpu_custom_call.1} parent=1 // pred_check_branch
      %359 = sbr.rel (0) target = $region25
    $region24: #{tpu_custom_call.1} parent=1 // pred_region
      %360 = dma.done [#allocation4], 1024
    $region25: #{tpu_custom_call.1} parent=1 // pred_fallthru
      _
    %361 = vsyncpa [#allocation3], 1
    %362 = vsyncpa [#allocation6], 1
    %363 = vsyncpa [#allocation4], 1

</llo_original>
